<compile_context>
chip_gen: v5e
topology: v5e:2x2
jax: 0.10.0
libtpu: 0.0.40
codegen_flags: <defaults>
</compile_context>

<pallas_src>
import functools

import jax
import jax.numpy as jnp
from jax.experimental import pallas as pl
from jax.experimental.pallas import tpu as pltpu

LANE = 128
NARROW_FC3_MAX = 8   # n_actions <= this -> VPU/XLU fc3 with a narrow store


def _round_up(n, m):
    return ((n + m - 1) // m) * m


def mlp_kernel(x_ref, w1_ref, b1_ref, w2_ref, b2_ref, w3_ref, b3_ref, o_ref,
               *, narrow_fc3):
    x = x_ref[...]                      # (bm, n_states) fp32
    n_states = x_ref.shape[1]

    # ---- fc1 + ReLU --------------------------------------------------------
    # K = n_states is tiny: unrolled VPU broadcast FMAs instead of a
    # >96%-zero-padded MXU pass; bias folded into the first FMA.
    if n_states <= 16:
        acc = x[:, 0:1] * w1_ref[0:1, :] + b1_ref[...]
        for k in range(1, n_states):
            acc = acc + x[:, k:k + 1] * w1_ref[k:k + 1, :]
    else:
        acc = jnp.dot(x, w1_ref[...], preferred_element_type=jnp.float32)
        acc = acc + b1_ref[...]
    h1 = jnp.maximum(acc, 0.0)

    # ---- fc2 + ReLU (bf16 MXU operands, fp32 accumulate / fp32 epilogue) ----
    h2 = jnp.dot(h1.astype(w2_ref.dtype), w2_ref[...],
                 preferred_element_type=jnp.float32)
    h2 = jnp.maximum(h2 + b2_ref[...], 0.0)

    # ---- fc3 -----------------------------------------------------------------
    if narrow_fc3:
        # Tiny n_actions: per-column VPU multiply + XLU lane-reduce, stored as
        # a narrow (bm, n_actions) block (last dim == full array dim is legal).
        # Avoids a 98%-zero MXU pass and the 64x-inflated padded fp32 writeback.
        # w3_ref is (n_actions, hidden); b3_ref is (1, n_actions).
        n_actions = w3_ref.shape[0]
        for j in range(n_actions):
            col = jnp.sum(h2 * w3_ref[j:j + 1, :], axis=-1, keepdims=True)
            o_ref[:, j:j + 1] = (col + b3_ref[:, j:j + 1]).astype(o_ref.dtype)
    else:
        # Wide fc3: bf16 MXU into a lane-dense (multiple-of-128) slab.
        out = jnp.dot(h2.astype(w3_ref.dtype), w3_ref[...],
                      preferred_element_type=jnp.float32) + b3_ref[...]
        o_ref[...] = out.astype(o_ref.dtype)


@functools.partial(jax.jit,
                   static_argnames=("n_actions", "narrow_fc3", "block_b"))
def _mlp_forward(x, w1, b1, w2, b2, w3_k, b3_k, *,
                 n_actions, narrow_fc3, block_b):
    B, n_states = x.shape
    n_out = n_actions if narrow_fc3 else w3_k.shape[1]
    x = x.astype(jnp.float32)

    # Batch tiling: balance the grid so padding stays < 8 rows per block, and
    # keep >= 2 (even) blocks at large B so the "parallel" batch axis shards
    # across both TensorCores on dual-TC chips (v7x).
    block_b = max(8, _round_up(block_b, 8))
    num_blocks = max(1, pl.cdiv(B, block_b))
    if num_blocks == 1 and B >= 256:
        num_blocks = 2
    elif num_blocks > 1 and num_blocks % 2 == 1:
        num_blocks += 1
    bm = max(8, _round_up(pl.cdiv(B, num_blocks), 8))
    B_pad = bm * num_blocks
    if B_pad != B:
        x = jnp.pad(x, ((0, B_pad - B), (0, 0)))

    def resident(shape):
        # Constant index_map: one DMA, stays VMEM-resident across grid steps.
        return pl.BlockSpec(shape, lambda i: tuple(0 for _ in shape))

    out = pl.pallas_call(
        functools.partial(mlp_kernel, narrow_fc3=narrow_fc3),
        out_shape=jax.ShapeDtypeStruct((B_pad, n_out), jnp.float32),
        grid=(num_blocks,),
        in_specs=[
            pl.BlockSpec((bm, n_states), lambda i: (i, 0)),
            resident(w1.shape), resident(b1.shape),
            resident(w2.shape), resident(b2.shape),
            resident(w3_k.shape), resident(b3_k.shape),
        ],
        out_specs=pl.BlockSpec((bm, n_out), lambda i: (i, 0)),
        compiler_params=pltpu.CompilerParams(
            dimension_semantics=("parallel",)),
    )(x, w1, b1, w2, b2, w3_k, b3_k)

    out = out[:B]
    if not narrow_fc3:
        out = out[:, :n_actions]
    return out


def make_mlp_forward(w1, b1, w2, b2, w3, b3, *, block_b=2048):
    """One-time parameter prep (bf16 cast / transpose / pad), hoisted out of
    the per-call path.  Returns a forward(x) callable."""
    hidden = w1.shape[1]
    n_actions = w3.shape[1]
    narrow_fc3 = n_actions <= NARROW_FC3_MAX

    w1_k = jnp.asarray(w1, jnp.float32)
    b1_k = jnp.asarray(b1, jnp.float32).reshape(1, hidden)
    w2_k = jnp.asarray(w2, jnp.bfloat16)            # fc2 MXU operand
    b2_k = jnp.asarray(b2, jnp.float32).reshape(1, hidden)

    if narrow_fc3:
        # (n_actions, hidden) rows for the per-column VPU/XLU fc3 path.
        w3_k = jnp.asarray(w3, jnp.float32).T
        b3_k = jnp.asarray(b3, jnp.float32).reshape(1, n_actions)
    else:
        n_out_p = _round_up(n_actions, LANE)
        w3_k = jnp.zeros((hidden, n_out_p), jnp.bfloat16).at[:, :n_actions].set(
            jnp.asarray(w3, jnp.bfloat16))
        b3_k = jnp.zeros((1, n_out_p), jnp.float32).at[:, :n_actions].set(
            jnp.asarray(b3, jnp.float32).reshape(1, n_actions))

    def forward(x):
        return _mlp_forward(x, w1_k, b1_k, w2_k, b2_k, w3_k, b3_k,
                            n_actions=n_actions, narrow_fc3=narrow_fc3,
                            block_b=block_b)

    return forward


def init_linear_params(key, fan_in, fan_out):
    # Mirrors PyTorch nn.Linear default init: U(-1/sqrt(fan_in), 1/sqrt(fan_in))
    kw, kb = jax.random.split(key)
    bound = 1.0 / jnp.sqrt(jnp.float32(fan_in))
    w = jax.random.uniform(kw, (fan_in, fan_out), jnp.float32, -bound, bound)
    b = jax.random.uniform(kb, (1, fan_out), jnp.float32, -bound, bound)
    return w, b


def ref_forward(x, w1, b1, w2, b2, w3, b3):
    # Plain-JAX reference with the kernel's bf16-operand fc2 / fp32 fc1+fc3.
    h1 = jnp.maximum(x @ w1 + b1, 0.0)
    h2 = jnp.maximum(
        jnp.dot(h1.astype(jnp.bfloat16), w2.astype(jnp.bfloat16),
                preferred_element_type=jnp.float32) + b2, 0.0)
    return h2 @ w3 + b3


if __name__ == "__main__":
    n_states, n_actions, hidden_dim = 4, 2, 128

    key = jax.random.PRNGKey(0)
    kx, k1, k2, k3, kx2, kx3 = jax.random.split(key, 6)

    w1, b1 = init_linear_params(k1, n_states, hidden_dim)
    w2, b2 = init_linear_params(k2, hidden_dim, hidden_dim)
    w3, b3 = init_linear_params(k3, hidden_dim, n_actions)

    forward = make_mlp_forward(w1, b1, w2, b2, w3, b3, block_b=2048)

    # Small batch (module-spec shapes).
    x_small = jax.random.normal(kx, (2, n_states), jnp.float32)
    out_small = jax.block_until_ready(forward(x_small))
    ref_small = ref_forward(x_small, w1, b1, w2, b2, w3, b3)
    assert out_small.shape == (2, n_actions)
    assert jnp.allclose(out_small, ref_small, atol=1e-2, rtol=1e-2), \
        "mismatch vs reference (small batch)"

    # Larger batch: exercises the 2-block "parallel" grid (dual-TC sharding on
    # v7x) with resident weights and the narrow fc3 store.
    x_big = jax.random.normal(kx2, (512, n_states), jnp.float32)
    out_big = jax.block_until_ready(forward(x_big))
    ref_big = ref_forward(x_big, w1, b1, w2, b2, w3, b3)
    assert out_big.shape == (512, n_actions)
    assert jnp.allclose(out_big, ref_big, atol=1e-2, rtol=1e-2), \
        "mismatch vs reference (large batch)"

    # Uneven batch: balanced grid keeps padding < 8 rows (was up to block_b-1).
    x_odd = jax.random.normal(kx3, (300, n_states), jnp.float32)
    out_odd = jax.block_until_ready(forward(x_odd))
    ref_odd = ref_forward(x_odd, w1, b1, w2, b2, w3, b3)
    assert out_odd.shape == (300, n_actions)
    assert jnp.allclose(out_odd, ref_odd, atol=1e-2, rtol=1e-2), \
        "mismatch vs reference (uneven batch)"

    print("KERNEL_OK")
</pallas_src>

<mosaic_0001>
module attributes {stable_mosaic.version = 11 : i64} {
  func.func @mlp_kernel(%arg0: i32, %arg1: memref<8x4xf32, #tpu.memory_space<vmem>>, %arg2: memref<4x128xf32, #tpu.memory_space<vmem>>, %arg3: memref<1x128xf32, #tpu.memory_space<vmem>>, %arg4: memref<128x128xbf16, #tpu.memory_space<vmem>>, %arg5: memref<1x128xf32, #tpu.memory_space<vmem>>, %arg6: memref<2x128xf32, #tpu.memory_space<vmem>>, %arg7: memref<1x2xf32, #tpu.memory_space<vmem>>, %arg8: memref<8x2xf32, #tpu.memory_space<vmem>>) attributes {dimension_semantics = [#tpu.dimension_semantics<parallel>], iteration_bounds = array<i64: 1>, scalar_prefetch = 0 : i64, scratch_operands = 0 : i64, tpu.core_type = #tpu.core_type<tc>, window_params = [{transform_indices = @transform_0, window_bounds = array<i64: 8, 4>}, {pipeline_mode = #tpu.pipeline_mode<synchronous>, transform_indices = @transform_1, window_bounds = array<i64: 4, 128>}, {pipeline_mode = #tpu.pipeline_mode<synchronous>, transform_indices = @transform_2, window_bounds = array<i64: 1, 128>}, {pipeline_mode = #tpu.pipeline_mode<synchronous>, transform_indices = @transform_3, window_bounds = array<i64: 128, 128>}, {pipeline_mode = #tpu.pipeline_mode<synchronous>, transform_indices = @transform_4, window_bounds = array<i64: 1, 128>}, {pipeline_mode = #tpu.pipeline_mode<synchronous>, transform_indices = @transform_5, window_bounds = array<i64: 2, 128>}, {pipeline_mode = #tpu.pipeline_mode<synchronous>, transform_indices = @transform_6, window_bounds = array<i64: 1, 2>}, {transform_indices = @transform_7, window_bounds = array<i64: 8, 2>}]} {
    %c0 = arith.constant 0 : index
    %c0_0 = arith.constant 0 : index
    %0 = vector.load %arg1[%c0, %c0_0] : memref<8x4xf32, #tpu.memory_space<vmem>>, vector<8x4xf32>
    %1 = vector.extract_strided_slice %0 {offsets = [0, 0], sizes = [8, 1], strides = [1, 1]} : vector<8x4xf32> to vector<8x1xf32>
    %c0_1 = arith.constant 0 : index
    %c0_2 = arith.constant 0 : index
    %2 = vector.load %arg2[%c0_1, %c0_2] : memref<4x128xf32, #tpu.memory_space<vmem>>, vector<1x128xf32>
    %3 = vector.broadcast %1 : vector<8x1xf32> to vector<8x128xf32>
    %4 = vector.broadcast %2 : vector<1x128xf32> to vector<8x128xf32>
    %5 = arith.mulf %3, %4 : vector<8x128xf32>
    %c0_3 = arith.constant 0 : index
    %c0_4 = arith.constant 0 : index
    %6 = vector.load %arg3[%c0_3, %c0_4] : memref<1x128xf32, #tpu.memory_space<vmem>>, vector<1x128xf32>
    %7 = vector.broadcast %6 : vector<1x128xf32> to vector<8x128xf32>
    %8 = arith.addf %5, %7 : vector<8x128xf32>
    %9 = vector.extract_strided_slice %0 {offsets = [0, 1], sizes = [8, 1], strides = [1, 1]} : vector<8x4xf32> to vector<8x1xf32>
    %c1 = arith.constant 1 : index
    %c0_5 = arith.constant 0 : index
    %10 = vector.load %arg2[%c1, %c0_5] : memref<4x128xf32, #tpu.memory_space<vmem>>, vector<1x128xf32>
    %11 = vector.broadcast %9 : vector<8x1xf32> to vector<8x128xf32>
    %12 = vector.broadcast %10 : vector<1x128xf32> to vector<8x128xf32>
    %13 = arith.mulf %11, %12 : vector<8x128xf32>
    %14 = arith.addf %8, %13 : vector<8x128xf32>
    %15 = vector.extract_strided_slice %0 {offsets = [0, 2], sizes = [8, 1], strides = [1, 1]} : vector<8x4xf32> to vector<8x1xf32>
    %c2 = arith.constant 2 : index
    %c0_6 = arith.constant 0 : index
    %16 = vector.load %arg2[%c2, %c0_6] : memref<4x128xf32, #tpu.memory_space<vmem>>, vector<1x128xf32>
    %17 = vector.broadcast %15 : vector<8x1xf32> to vector<8x128xf32>
    %18 = vector.broadcast %16 : vector<1x128xf32> to vector<8x128xf32>
    %19 = arith.mulf %17, %18 : vector<8x128xf32>
    %20 = arith.addf %14, %19 : vector<8x128xf32>
    %21 = vector.extract_strided_slice %0 {offsets = [0, 3], sizes = [8, 1], strides = [1, 1]} : vector<8x4xf32> to vector<8x1xf32>
    %c3 = arith.constant 3 : index
    %c0_7 = arith.constant 0 : index
    %22 = vector.load %arg2[%c3, %c0_7] : memref<4x128xf32, #tpu.memory_space<vmem>>, vector<1x128xf32>
    %23 = vector.broadcast %21 : vector<8x1xf32> to vector<8x128xf32>
    %24 = vector.broadcast %22 : vector<1x128xf32> to vector<8x128xf32>
    %25 = arith.mulf %23, %24 : vector<8x128xf32>
    %26 = arith.addf %20, %25 : vector<8x128xf32>
    %cst = arith.constant 0.000000e+00 : f32
    %27 = vector.broadcast %cst : f32 to vector<8x128xf32>
    %28 = arith.maximumf %26, %27 : vector<8x128xf32>
    %29 = arith.truncf %28 : vector<8x128xf32> to vector<8x128xbf16>
    %c0_8 = arith.constant 0 : index
    %c0_9 = arith.constant 0 : index
    %30 = vector.load %arg4[%c0_8, %c0_9] : memref<128x128xbf16, #tpu.memory_space<vmem>>, vector<128x128xbf16>
    %cst_10 = arith.constant dense<0.000000e+00> : vector<8x128xf32>
    %31 = tpu.matmul %29, %30, %cst_10 {dimension_numbers = #tpu.dot_dimension_numbers<[1], [0], [0], [1], [0, 0, 1, 1], [], []>} : vector<8x128xbf16>, vector<128x128xbf16>, vector<8x128xf32> -> vector<8x128xf32>
    %c0_11 = arith.constant 0 : index
    %c0_12 = arith.constant 0 : index
    %32 = vector.load %arg5[%c0_11, %c0_12] : memref<1x128xf32, #tpu.memory_space<vmem>>, vector<1x128xf32>
    %33 = vector.broadcast %32 : vector<1x128xf32> to vector<8x128xf32>
    %34 = arith.addf %31, %33 : vector<8x128xf32>
    %cst_13 = arith.constant 0.000000e+00 : f32
    %35 = vector.broadcast %cst_13 : f32 to vector<8x128xf32>
    %36 = arith.maximumf %34, %35 : vector<8x128xf32>
    %c0_14 = arith.constant 0 : index
    %c0_15 = arith.constant 0 : index
    %37 = vector.load %arg6[%c0_14, %c0_15] : memref<2x128xf32, #tpu.memory_space<vmem>>, vector<1x128xf32>
    %38 = vector.broadcast %37 : vector<1x128xf32> to vector<8x128xf32>
    %39 = arith.mulf %36, %38 : vector<8x128xf32>
    %cst_16 = arith.constant dense<0.000000e+00> : vector<8xf32>
    %40 = vector.multi_reduction <add>, %39, %cst_16 [1] : vector<8x128xf32> to vector<8xf32>
    %41 = vector.shape_cast %40 : vector<8xf32> to vector<8x1xf32>
    %c0_17 = arith.constant 0 : index
    %c0_18 = arith.constant 0 : index
    %42 = vector.load %arg7[%c0_17, %c0_18] : memref<1x2xf32, #tpu.memory_space<vmem>>, vector<1x1xf32>
    %43 = vector.broadcast %42 : vector<1x1xf32> to vector<8x1xf32>
    %44 = arith.addf %41, %43 : vector<8x1xf32>
    %c0_19 = arith.constant 0 : index
    %c0_20 = arith.constant 0 : index
    %45 = vector.load %arg8[%c0_19, %c0_20] : memref<8x2xf32, #tpu.memory_space<vmem>>, vector<8x1xf32>
    tpu.vector_store %arg8[%c0_19, %c0_20], %44 {strides = array<i32>} : memref<8x2xf32, #tpu.memory_space<vmem>>, vector<8x1xf32>,
    %c1_21 = arith.constant 1 : index
    %c0_22 = arith.constant 0 : index
    %46 = vector.load %arg6[%c1_21, %c0_22] : memref<2x128xf32, #tpu.memory_space<vmem>>, vector<1x128xf32>
    %47 = vector.broadcast %46 : vector<1x128xf32> to vector<8x128xf32>
    %48 = arith.mulf %36, %47 : vector<8x128xf32>
    %cst_23 = arith.constant dense<0.000000e+00> : vector<8xf32>
    %49 = vector.multi_reduction <add>, %48, %cst_23 [1] : vector<8x128xf32> to vector<8xf32>
    %50 = vector.shape_cast %49 : vector<8xf32> to vector<8x1xf32>
    %c0_24 = arith.constant 0 : index
    %c1_25 = arith.constant 1 : index
    %51 = vector.load %arg7[%c0_24, %c1_25] : memref<1x2xf32, #tpu.memory_space<vmem>>, vector<1x1xf32>
    %52 = vector.broadcast %51 : vector<1x1xf32> to vector<8x1xf32>
    %53 = arith.addf %50, %52 : vector<8x1xf32>
    %c0_26 = arith.constant 0 : index
    %c1_27 = arith.constant 1 : index
    %54 = vector.load %arg8[%c0_26, %c1_27] : memref<8x2xf32, #tpu.memory_space<vmem>>, vector<8x1xf32>
    tpu.vector_store %arg8[%c0_26, %c1_27], %53 {strides = array<i32>} : memref<8x2xf32, #tpu.memory_space<vmem>>, vector<8x1xf32>,
    return
  }
  func.func @transform_0(%arg0: i32) -> (i32, i32) {
    %c0_i32 = arith.constant 0 : i32
    %c0_i32_0 = arith.constant 0 : i32
    return %arg0, %c0_i32 : i32, i32
  }
  func.func @transform_1(%arg0: i32) -> (i32, i32) {
    %c0_i32 = arith.constant 0 : i32
    %c0_i32_0 = arith.constant 0 : i32
    %c0_i32_1 = arith.constant 0 : i32
    return %c0_i32, %c0_i32_0 : i32, i32
  }
  func.func @transform_2(%arg0: i32) -> (i32, i32) {
    %c0_i32 = arith.constant 0 : i32
    %c0_i32_0 = arith.constant 0 : i32
    %c0_i32_1 = arith.constant 0 : i32
    return %c0_i32, %c0_i32_0 : i32, i32
  }
  func.func @transform_3(%arg0: i32) -> (i32, i32) {
    %c0_i32 = arith.constant 0 : i32
    %c0_i32_0 = arith.constant 0 : i32
    %c0_i32_1 = arith.constant 0 : i32
    return %c0_i32, %c0_i32_0 : i32, i32
  }
  func.func @transform_4(%arg0: i32) -> (i32, i32) {
    %c0_i32 = arith.constant 0 : i32
    %c0_i32_0 = arith.constant 0 : i32
    %c0_i32_1 = arith.constant 0 : i32
    return %c0_i32, %c0_i32_0 : i32, i32
  }
  func.func @transform_5(%arg0: i32) -> (i32, i32) {
    %c0_i32 = arith.constant 0 : i32
    %c0_i32_0 = arith.constant 0 : i32
    %c0_i32_1 = arith.constant 0 : i32
    return %c0_i32, %c0_i32_0 : i32, i32
  }
  func.func @transform_6(%arg0: i32) -> (i32, i32) {
    %c0_i32 = arith.constant 0 : i32
    %c0_i32_0 = arith.constant 0 : i32
    %c0_i32_1 = arith.constant 0 : i32
    return %c0_i32, %c0_i32_0 : i32, i32
  }
  func.func @transform_7(%arg0: i32) -> (i32, i32) {
    %c0_i32 = arith.constant 0 : i32
    %c0_i32_0 = arith.constant 0 : i32
    return %arg0, %c0_i32 : i32, i32
  }
}

</mosaic_0001>

<llo_original>
// kernel: _mlp_forward.1
$region0: #{_mlp_forward.1}
  #allocation0 [shape = 'u32[]', space=smem, size = 0x4, offset = 0x4, fixed_abs, tag = 'smem constant byte address 0x4 - core index']
  #allocation1 [shape = 'u32[72,128]{1,0:T(1,128)}', space=vmem, size = 0x9000, scoped, tag = 'internal scratch']
  %s0 = inlined_call_operand.vmem [shape: f32[8,4], index: 0, kind: input, shape index: {}]
  %s1 = inlined_call_operand.vmem [shape: f32[4,128], index: 1, kind: input, shape index: {}]
  %s2 = inlined_call_operand.vmem [shape: f32[1,128], index: 2, kind: input, shape index: {}]
  %s3 = inlined_call_operand.hbm [shape: bf16[128,128], index: 3, kind: input, shape index: {}]
  %s4 = inlined_call_operand.vmem [shape: f32[1,128], index: 4, kind: input, shape index: {}]
  %s5 = inlined_call_operand.vmem [shape: f32[2,128], index: 5, kind: input, shape index: {}]
  %s6 = inlined_call_operand.vmem [shape: f32[1,2], index: 6, kind: input, shape index: {}]
  %s7 = inlined_call_operand.vmem [shape: f32[8,2], index: 7, kind: output, shape index: {}]
  %s8 = sld [smem:[#allocation0]]
  $region42: #{_mlp_forward.1} parent=0
    _
  %s10 = ssub.s32 1, %s8
  %s11 = scalar_select 0, %s10, %s8
  $region1: #{_mlp_forward.1} parent=0
    #allocation2 [shape = 'u8[32768]{0}', space=vmem, size = 0x8000, scoped, tag = 'input window, operand 3, single buffered']
    #allocation3 [shape = 's32[1]{0}', space=sflag, size = 0x4, scoped, tag = 'scoped memory for _mlp_forward.1']
    %12 = vsyncpa [#allocation3], 0
    // Predicated region
    $region2: #{_mlp_forward.1} parent=1 // pred_check
      _
    $region3: #{_mlp_forward.1} parent=1 // pred_check_branch
      %14 = sbr.rel (0) target = $region5
    $region4: #{_mlp_forward.1} parent=1 // pred_region
      _
    $region5: #{_mlp_forward.1} parent=1 // pred_fallthru
      _
    // Predicated region
    $region6: #{_mlp_forward.1} parent=1 // pred_check
      _
    $region7: #{_mlp_forward.1} parent=1 // pred_check_branch
      %16 = sbr.rel (0) target = $region9
    $region8: #{_mlp_forward.1} parent=1 // pred_region
      _
    $region9: #{_mlp_forward.1} parent=1 // pred_fallthru
      _
    // Predicated region
    $region10: #{_mlp_forward.1} parent=1 // pred_check
      _
    $region11: #{_mlp_forward.1} parent=1 // pred_check_branch
      %18 = sbr.rel (0) target = $region13
    $region12: #{_mlp_forward.1} parent=1 // pred_region
      _
    $region13: #{_mlp_forward.1} parent=1 // pred_fallthru
      _
    // Predicated region
    $region14: #{_mlp_forward.1} parent=1 // pred_check
      _
    $region15: #{_mlp_forward.1} parent=1 // pred_check_branch
      %20 = sbr.rel (0) target = $region17
    $region16: #{_mlp_forward.1} parent=1 // pred_region
      %22 = vsyncadd [#allocation3], 0
      %s23 = sshll.u32 %s3, 4
      %s24 = int_to_ptr.hbm [resolvable:$true] %s23
      %s25 = sshll.u32 [#allocation2], 4
      %s26 = int_to_ptr.vmem [resolvable:$true] %s25
      %31 = dma.hbm_to_vmem [thread:$0]  %s24, 1024, %s26, [#allocation3], 64, 64, 4
    $region17: #{_mlp_forward.1} parent=1 // pred_fallthru
      _
    // Predicated region
    $region18: #{_mlp_forward.1} parent=1 // pred_check
      _
    $region19: #{_mlp_forward.1} parent=1 // pred_check_branch
      %33 = sbr.rel (0) target = $region21
    $region20: #{_mlp_forward.1} parent=1 // pred_region
      _
    $region21: #{_mlp_forward.1} parent=1 // pred_fallthru
      _
    // Predicated region
    $region22: #{_mlp_forward.1} parent=1 // pred_check
      _
    $region23: #{_mlp_forward.1} parent=1 // pred_check_branch
      %35 = sbr.rel (0) target = $region25
    $region24: #{_mlp_forward.1} parent=1 // pred_region
      _
    $region25: #{_mlp_forward.1} parent=1 // pred_fallthru
      _
    // Predicated region
    $region26: #{_mlp_forward.1} parent=1 // pred_check
      _
    $region27: #{_mlp_forward.1} parent=1 // pred_check_branch
      %37 = sbr.rel (0) target = $region29
    $region28: #{_mlp_forward.1} parent=1 // pred_region
      _
    $region29: #{_mlp_forward.1} parent=1 // pred_fallthru
      _
    // Predicated region
    $region30: #{_mlp_forward.1} parent=1 // pred_check
      _
    $region31: #{_mlp_forward.1} parent=1 // pred_check_branch
      %39 = sbr.rel (0) target = $region33
    $region32: #{_mlp_forward.1} parent=1 // pred_region
      %41 = dma.done [#allocation3], 1024
    $region33: #{_mlp_forward.1} parent=1 // pred_fallthru
      _
    %v42 = vld [vmem:[%s0] sm:$0xff]
    %v43 = vld [vmem:[%s1] sm:$0x1]
    %45 = vset.pattern.permute.xlu0 0
    %46 = vperm.xlu0 %45, %v42
    %v47 = vpop.permute.xlu0 %46
    %v49 = vperm.slane %v43, 0
    %v50 = vmul.f32 %v47, %v49
    %v51 = vld [vmem:[%s2] sm:$0x1]
    %v53 = vperm.slane %v51, 0
    %v55 = vadd.f32 %v50, %v53
    %v56 = vld [vmem:[%s1 + $0x1] sm:$0x1]
    %57 = vset.pattern.permute.xlu0 1
    %58 = vperm.xlu0 %57, %v42
    %v59 = vpop.permute.xlu0 %58
    %v61 = vperm.slane %v56, 0
    %v62 = vmul.f32 %v59, %v61
    %v63 = vadd.f32 %v55, %v62
    %v64 = vld [vmem:[%s1 + $0x2] sm:$0x1]
    %65 = vset.pattern.permute.xlu0 2
    %66 = vperm.xlu0 %65, %v42
    %v67 = vpop.permute.xlu0 %66
    %v69 = vperm.slane %v64, 0
    %v70 = vmul.f32 %v67, %v69
    %v71 = vadd.f32 %v63, %v70
    %v72 = vld [vmem:[%s1 + $0x3] sm:$0x1]
    %73 = vset.pattern.permute.xlu0 3
    %74 = vperm.xlu0 %73, %v42
    %v75 = vpop.permute.xlu0 %74
    %v77 = vperm.slane %v72, 0
    %v78 = vmul.f32 %v75, %v77
    %v79 = vadd.f32 %v71, %v78
    %v80 = vmax.f32 %v79, 0.0
    %v81 = vpack.c.bf16 %v80, %v80
    %v82 = vld [vmem:[#allocation2] sm:$0xf]
    %v83 = vld [vmem:[#allocation2 + $0x4] sm:$0xf]
    %v84 = vld [vmem:[#allocation2 + $0x8] sm:$0xf]
    %v85 = vld [vmem:[#allocation2 + $0xc] sm:$0xf]
    %v86 = vld [vmem:[#allocation2 + $0x10] sm:$0xf]
    %v87 = vld [vmem:[#allocation2 + $0x14] sm:$0xf]
    %v88 = vld [vmem:[#allocation2 + $0x18] sm:$0xf]
    %v89 = vld [vmem:[#allocation2 + $0x1c] sm:$0xf]
    %v90 = vld [vmem:[#allocation2 + $0x20] sm:$0xf]
    %v91 = vld [vmem:[#allocation2 + $0x24] sm:$0xf]
    %v92 = vld [vmem:[#allocation2 + $0x28] sm:$0xf]
    %v93 = vld [vmem:[#allocation2 + $0x2c] sm:$0xf]
    %v94 = vld [vmem:[#allocation2 + $0x30] sm:$0xf]
    %v95 = vld [vmem:[#allocation2 + $0x34] sm:$0xf]
    %v96 = vld [vmem:[#allocation2 + $0x38] sm:$0xf]
    %v97 = vld [vmem:[#allocation2 + $0x3c] sm:$0xf]
    %v98 = vld [vmem:[%s4] sm:$0x1]
    %v100 = vperm.slane %v98, 0
    %v118 = vunpack.c.l.b16 %v82
    %v119 = vunpack.c.l.b16 %v83
    %v120 = vunpack.c.l.b16 %v84
    %v121 = vunpack.c.l.b16 %v85
    %v122 = vunpack.c.l.b16 %v86
    %v123 = vunpack.c.l.b16 %v87
    %v124 = vunpack.c.l.b16 %v88
    %v125 = vunpack.c.l.b16 %v89
    %v126 = vunpack.c.l.b16 %v90
    %v127 = vunpack.c.l.b16 %v91
    %v128 = vunpack.c.l.b16 %v92
    %v129 = vunpack.c.l.b16 %v93
    %v130 = vunpack.c.l.b16 %v94
    %v131 = vunpack.c.l.b16 %v95
    %v132 = vunpack.c.l.b16 %v96
    %v133 = vunpack.c.l.b16 %v97
    %v134 = vpack.c.b16 %v119, %v118
    %v135 = vpack.c.b16 %v121, %v120
    %v136 = vpack.c.b16 %v123, %v122
    %v137 = vpack.c.b16 %v125, %v124
    %v138 = vpack.c.b16 %v127, %v126
    %v139 = vpack.c.b16 %v129, %v128
    %v140 = vpack.c.b16 %v131, %v130
    %v141 = vpack.c.b16 %v133, %v132
    %150 = vmatpush.bf16.msra.mxu0 %v141
    %151 = vmatpush.bf16.msra.mxu0 %v140
    %152 = vmatpush.bf16.msra.mxu0 %v139
    %153 = vmatpush.bf16.msra.mxu0 %v138
    %154 = vmatpush.bf16.msra.mxu0 %v137
    %155 = vmatpush.bf16.msra.mxu0 %v136
    %156 = vmatpush.bf16.msra.mxu0 %v135
    %157 = vmatpush.bf16.msra.mxu0 %v134
    %158 = vmatmul.bf16.gmra.mxu0 %v81
    %v159 = vpop.f32.mrf.mxu0
    %v160 = vadd.f32 %v100, %v159
    %v161 = vpop.f32.mrf.mxu0
    %162 = vdwg.mxu0
    %v163 = vmax.f32 %v160, 0.0
    %v164 = vld [vmem:[%s5] sm:$0x1]
    %v165 = vperm.slane %v164, 0
    %v166 = vmul.f32 %v163, %v165
    %167 = vadd.xlane.f32.xlu0 %v166
    %v168 = vpop.xlane.xlu0 %167
    %v169 = vld [vmem:[%s6] sm:$0x1]
    %v171 = vperm.slane %v169, 0
    %v173 = vadd.f32 %v168, %v171
    %vm174 = vcmask 7168
    %175 = vst.msk [vmem:[%s7] sm:$0xff] %vm174, %v173
    %v176 = vld [vmem:[%s5 + $0x1] sm:$0x1]
    %v177 = vperm.slane %v176, 0
    %v178 = vmul.f32 %v163, %v177
    %179 = vadd.xlane.f32.xlu0 %v178
    %v180 = vpop.xlane.xlu0 %179
    %v181 = vld [vmem:[%s6] sm:$0x1]
    %v183 = vperm.slane %v181, 0
    %v185 = vadd.f32 %v180, %v183
    %vm186 = vcmask 15368
    %187 = vst.msk [vmem:[%s7] sm:$0xff] %vm186, %v185
    // Predicated region
    $region34: #{_mlp_forward.1} parent=1 // pred_check
      _
    $region35: #{_mlp_forward.1} parent=1 // pred_check_branch
      %189 = sbr.rel (0) target = $region37
    $region36: #{_mlp_forward.1} parent=1 // pred_region
      _
    $region37: #{_mlp_forward.1} parent=1 // pred_fallthru
      _
    // Predicated region
    $region38: #{_mlp_forward.1} parent=1 // pred_check
      _
    $region39: #{_mlp_forward.1} parent=1 // pred_check_branch
      %191 = sbr.rel (0) target = $region41
    $region40: #{_mlp_forward.1} parent=1 // pred_region
      _
    $region41: #{_mlp_forward.1} parent=1 // pred_fallthru
      _
    %192 = vsyncpa [#allocation3], 1

</llo_original>
